<compile_context>
chip_gen: v6e
topology: v6e:2x2x1
jax: 0.10.0
libtpu: 0.0.40
codegen_flags: <defaults>
</compile_context>

<pallas_src>
import jax
import jax.numpy as jnp
from jax.experimental import pallas as pl
from jax.experimental.pallas import tpu as pltpu


def _round_up(x, m):
    return ((x + m - 1) // m) * m


def mdn_kernel(x_ref, wpi_ref, bpi_ref, wsg_ref, bsg_ref, wmu_ref, bmu_ref,
               pi_ref, sigma_ref, mu_ref):
    """One batch tile: three small linears + softmax / exp / identity heads."""
    x = x_ref[...]                                                  # (TB, D)

    # pi head: linear -> exact, max-stabilized softmax over the G gaussians.
    logits = jnp.dot(x, wpi_ref[...],
                     preferred_element_type=jnp.float32) + bpi_ref[...]   # (TB, G)
    m = jnp.max(logits, axis=1, keepdims=True)
    e = jnp.exp(logits - m)
    denom = jnp.sum(e, axis=1, keepdims=True)
    pi_ref[...] = (e / denom).astype(pi_ref.dtype)   # exact divide: rows sum to 1

    # sigma head: linear -> exp (exp touches only these G*O lanes).
    s = jnp.dot(x, wsg_ref[...],
                preferred_element_type=jnp.float32) + bsg_ref[...]        # (TB, GO)
    sigma_ref[...] = jnp.exp(s).astype(sigma_ref.dtype)

    # mu head: linear only (never enters the exp).
    mu = jnp.dot(x, wmu_ref[...],
                 preferred_element_type=jnp.float32) + bmu_ref[...]       # (TB, GO)
    mu_ref[...] = mu.astype(mu_ref.dtype)


def mdn_forward(x, params, num_gaussians, out_features, *, tb_max=2048,
                compute_dtype=None):
    """x: (B, D). Returns (pi (B,G), sigma (B,G,O), mu (B,G,O))."""
    B, D = x.shape
    G, O = num_gaussians, out_features
    GO = G * O
    out_dtype = x.dtype

    if compute_dtype is not None:
        # Optional bf16 path (v6e/v7x): halves streamed-x / resident-weight DMA.
        # Gated off by default: mu's atol=1e-5 check would not pass in bf16.
        x = x.astype(compute_dtype)
        params = {k: v.astype(compute_dtype) for k, v in params.items()}

    # Tile choice: large tiles amortize the ~0.35us per-grid-step overhead, but
    # keep >= 4 grid steps (for non-tiny B) so pipelining overlaps DMA/compute
    # and the "parallel" axis can shard across both v7x TensorCores.
    TB = min(tb_max, max(8, _round_up(-(-B // 4), 8)))
    B_pad = _round_up(B, TB)
    if B_pad != B:
        x = jnp.pad(x, ((0, B_pad - B), (0, 0)))
    grid = (B_pad // TB,)

    # VMEM budget: resident weights/biases + double-buffered x/output tiles,
    # with generous headroom for in-kernel intermediates; capped at 32 MiB so
    # it also fits v7x's scoped default.
    in_elem = jnp.dtype(x.dtype).itemsize
    out_elem = jnp.dtype(out_dtype).itemsize
    w_bytes = in_elem * (D * (G + 2 * GO) + (G + 2 * GO))
    stream_bytes = 2 * TB * (D * in_elem + (G + 2 * GO) * out_elem)
    interm_bytes = 4 * TB * (G + 2 * GO) * 4
    need = w_bytes + stream_bytes + interm_bytes
    vmem_limit = int(min(32 * 1024 * 1024, max(4 * 1024 * 1024, 2 * need)))

    pi_pad, sigma_pad, mu_pad = pl.pallas_call(
        mdn_kernel,
        out_shape=(
            jax.ShapeDtypeStruct((B_pad, G), out_dtype),
            jax.ShapeDtypeStruct((B_pad, GO), out_dtype),
            jax.ShapeDtypeStruct((B_pad, GO), out_dtype),
        ),
        grid_spec=pltpu.PrefetchScalarGridSpec(
            num_scalar_prefetch=0,
            grid=grid,
            in_specs=[
                pl.BlockSpec((TB, D), lambda i: (i, 0)),    # x: streamed per step
                pl.BlockSpec((D, G), lambda i: (0, 0)),     # weights/biases:
                pl.BlockSpec((1, G), lambda i: (0, 0)),     #   constant index_map
                pl.BlockSpec((D, GO), lambda i: (0, 0)),    #   -> VMEM-resident
                pl.BlockSpec((1, GO), lambda i: (0, 0)),
                pl.BlockSpec((D, GO), lambda i: (0, 0)),
                pl.BlockSpec((1, GO), lambda i: (0, 0)),
            ],
            out_specs=(
                pl.BlockSpec((TB, G), lambda i: (i, 0)),
                pl.BlockSpec((TB, GO), lambda i: (i, 0)),
                pl.BlockSpec((TB, GO), lambda i: (i, 0)),
            ),
        ),
        compiler_params=pltpu.CompilerParams(
            dimension_semantics=("parallel",),
            vmem_limit_bytes=vmem_limit,
        ),
    )(x, params["w_pi"], params["b_pi"],
      params["w_sigma"], params["b_sigma"],
      params["w_mu"], params["b_mu"])

    if B_pad != B:
        pi_pad = pi_pad[:B]
        sigma_pad = sigma_pad[:B]
        mu_pad = mu_pad[:B]
    pi = pi_pad
    sigma = sigma_pad.reshape(B, G, O)   # contiguous split of last dim: free reshape
    mu = mu_pad.reshape(B, G, O)
    return pi, sigma, mu


def init_params(key, in_features, out_features, num_gaussians):
    """Deterministic init mimicking nn.Linear default (uniform +/- 1/sqrt(fan_in))."""
    bound = 1.0 / (in_features ** 0.5)
    keys = jax.random.split(key, 6)
    G = num_gaussians
    GO = num_gaussians * out_features
    u = lambda k, shape: jax.random.uniform(k, shape, jnp.float32, -bound, bound)
    return {
        "w_pi":    u(keys[0], (in_features, G)),
        "b_pi":    u(keys[1], (1, G)),
        "w_sigma": u(keys[2], (in_features, GO)),
        "b_sigma": u(keys[3], (1, GO)),
        "w_mu":    u(keys[4], (in_features, GO)),
        "b_mu":    u(keys[5], (1, GO)),
    }


if __name__ == "__main__":
    in_features = 32
    out_features = 4
    num_gaussians = 8
    batch = 256          # small, but exercises a 4-step batch grid (TB=64)

    key = jax.random.PRNGKey(0)
    kx, kp = jax.random.split(key)
    x = jax.random.normal(kx, (batch, in_features), dtype=jnp.float32)
    params = init_params(kp, in_features, out_features, num_gaussians)

    pi, sigma, mu = mdn_forward(x, params, num_gaussians, out_features)
    jax.block_until_ready((pi, sigma, mu))

    # sanity check against pure-JAX reference
    logits = x @ params["w_pi"] + params["b_pi"]
    pi_ref = jax.nn.softmax(logits, axis=1)
    sigma_ref = jnp.exp(x @ params["w_sigma"] + params["b_sigma"]).reshape(
        batch, num_gaussians, out_features)
    mu_ref = (x @ params["w_mu"] + params["b_mu"]).reshape(
        batch, num_gaussians, out_features)

    assert pi.shape == (batch, num_gaussians)
    assert sigma.shape == (batch, num_gaussians, out_features)
    assert mu.shape == (batch, num_gaussians, out_features)
    assert jnp.allclose(pi, pi_ref, atol=1e-5, rtol=1e-5), "pi mismatch"
    assert jnp.allclose(jnp.sum(pi, axis=1), 1.0, atol=1e-5), "pi rows must sum to 1"
    assert jnp.allclose(sigma, sigma_ref, atol=1e-4, rtol=1e-5), "sigma mismatch"
    assert jnp.allclose(mu, mu_ref, atol=1e-5), "mu mismatch"

    print("KERNEL_OK")
</pallas_src>

<mosaic_0001>
module attributes {stable_mosaic.version = 11 : i64} {
  func.func @mdn_kernel(%arg0: i32, %arg1: memref<64x32xf32, #tpu.memory_space<vmem>>, %arg2: memref<32x8xf32, #tpu.memory_space<vmem>>, %arg3: memref<1x8xf32, #tpu.memory_space<vmem>>, %arg4: memref<32x32xf32, #tpu.memory_space<vmem>>, %arg5: memref<1x32xf32, #tpu.memory_space<vmem>>, %arg6: memref<32x32xf32, #tpu.memory_space<vmem>>, %arg7: memref<1x32xf32, #tpu.memory_space<vmem>>, %arg8: memref<64x8xf32, #tpu.memory_space<vmem>>, %arg9: memref<64x32xf32, #tpu.memory_space<vmem>>, %arg10: memref<64x32xf32, #tpu.memory_space<vmem>>) attributes {dimension_semantics = [#tpu.dimension_semantics<parallel>], iteration_bounds = array<i64: 4>, scalar_prefetch = 0 : i64, scratch_operands = 0 : i64, tpu.core_type = #tpu.core_type<tc>, window_params = [{transform_indices = @transform_0, window_bounds = array<i64: 64, 32>}, {pipeline_mode = #tpu.pipeline_mode<synchronous>, transform_indices = @transform_1, window_bounds = array<i64: 32, 8>}, {pipeline_mode = #tpu.pipeline_mode<synchronous>, transform_indices = @transform_2, window_bounds = array<i64: 1, 8>}, {pipeline_mode = #tpu.pipeline_mode<synchronous>, transform_indices = @transform_3, window_bounds = array<i64: 32, 32>}, {pipeline_mode = #tpu.pipeline_mode<synchronous>, transform_indices = @transform_4, window_bounds = array<i64: 1, 32>}, {pipeline_mode = #tpu.pipeline_mode<synchronous>, transform_indices = @transform_5, window_bounds = array<i64: 32, 32>}, {pipeline_mode = #tpu.pipeline_mode<synchronous>, transform_indices = @transform_6, window_bounds = array<i64: 1, 32>}, {transform_indices = @transform_7, window_bounds = array<i64: 64, 8>}, {transform_indices = @transform_8, window_bounds = array<i64: 64, 32>}, {transform_indices = @transform_9, window_bounds = array<i64: 64, 32>}]} {
    %c0 = arith.constant 0 : index
    %c0_0 = arith.constant 0 : index
    %0 = vector.load %arg1[%c0, %c0_0] : memref<64x32xf32, #tpu.memory_space<vmem>>, vector<64x32xf32>
    %c0_1 = arith.constant 0 : index
    %c0_2 = arith.constant 0 : index
    %1 = vector.load %arg2[%c0_1, %c0_2] : memref<32x8xf32, #tpu.memory_space<vmem>>, vector<32x8xf32>
    %cst = arith.constant dense<0.000000e+00> : vector<64x8xf32>
    %2 = tpu.matmul %0, %1, %cst {dimension_numbers = #tpu.dot_dimension_numbers<[1], [0], [0], [1], [0, 0, 1, 1], [], []>} : vector<64x32xf32>, vector<32x8xf32>, vector<64x8xf32> -> vector<64x8xf32>
    %c0_3 = arith.constant 0 : index
    %c0_4 = arith.constant 0 : index
    %3 = vector.load %arg3[%c0_3, %c0_4] : memref<1x8xf32, #tpu.memory_space<vmem>>, vector<1x8xf32>
    %4 = vector.broadcast %3 : vector<1x8xf32> to vector<64x8xf32>
    %5 = arith.addf %2, %4 : vector<64x8xf32>
    %cst_5 = arith.constant dense<0xFF800000> : vector<64xf32>
    %6 = vector.multi_reduction <maximumf>, %5, %cst_5 [1] : vector<64x8xf32> to vector<64xf32>
    %7 = vector.shape_cast %6 : vector<64xf32> to vector<64x1xf32>
    %8 = vector.broadcast %7 : vector<64x1xf32> to vector<64x8xf32>
    %9 = arith.subf %5, %8 : vector<64x8xf32>
    %10 = math.exp %9 : vector<64x8xf32>
    %cst_6 = arith.constant dense<0.000000e+00> : vector<64xf32>
    %11 = vector.multi_reduction <add>, %10, %cst_6 [1] : vector<64x8xf32> to vector<64xf32>
    %12 = vector.shape_cast %11 : vector<64xf32> to vector<64x1xf32>
    %13 = vector.broadcast %12 : vector<64x1xf32> to vector<64x8xf32>
    %14 = arith.divf %10, %13 : vector<64x8xf32>
    %c0_7 = arith.constant 0 : index
    %c0_8 = arith.constant 0 : index
    %15 = vector.load %arg8[%c0_7, %c0_8] : memref<64x8xf32, #tpu.memory_space<vmem>>, vector<64x8xf32>
    tpu.vector_store %arg8[%c0_7, %c0_8], %14 {strides = array<i32>} : memref<64x8xf32, #tpu.memory_space<vmem>>, vector<64x8xf32>,
    %c0_9 = arith.constant 0 : index
    %c0_10 = arith.constant 0 : index
    %16 = vector.load %arg4[%c0_9, %c0_10] : memref<32x32xf32, #tpu.memory_space<vmem>>, vector<32x32xf32>
    %cst_11 = arith.constant dense<0.000000e+00> : vector<64x32xf32>
    %17 = tpu.matmul %0, %16, %cst_11 {dimension_numbers = #tpu.dot_dimension_numbers<[1], [0], [0], [1], [0, 0, 1, 1], [], []>} : vector<64x32xf32>, vector<32x32xf32>, vector<64x32xf32> -> vector<64x32xf32>
    %c0_12 = arith.constant 0 : index
    %c0_13 = arith.constant 0 : index
    %18 = vector.load %arg5[%c0_12, %c0_13] : memref<1x32xf32, #tpu.memory_space<vmem>>, vector<1x32xf32>
    %19 = vector.broadcast %18 : vector<1x32xf32> to vector<64x32xf32>
    %20 = arith.addf %17, %19 : vector<64x32xf32>
    %21 = math.exp %20 : vector<64x32xf32>
    %c0_14 = arith.constant 0 : index
    %c0_15 = arith.constant 0 : index
    %22 = vector.load %arg9[%c0_14, %c0_15] : memref<64x32xf32, #tpu.memory_space<vmem>>, vector<64x32xf32>
    tpu.vector_store %arg9[%c0_14, %c0_15], %21 {strides = array<i32>} : memref<64x32xf32, #tpu.memory_space<vmem>>, vector<64x32xf32>,
    %c0_16 = arith.constant 0 : index
    %c0_17 = arith.constant 0 : index
    %23 = vector.load %arg6[%c0_16, %c0_17] : memref<32x32xf32, #tpu.memory_space<vmem>>, vector<32x32xf32>
    %cst_18 = arith.constant dense<0.000000e+00> : vector<64x32xf32>
    %24 = tpu.matmul %0, %23, %cst_18 {dimension_numbers = #tpu.dot_dimension_numbers<[1], [0], [0], [1], [0, 0, 1, 1], [], []>} : vector<64x32xf32>, vector<32x32xf32>, vector<64x32xf32> -> vector<64x32xf32>
    %c0_19 = arith.constant 0 : index
    %c0_20 = arith.constant 0 : index
    %25 = vector.load %arg7[%c0_19, %c0_20] : memref<1x32xf32, #tpu.memory_space<vmem>>, vector<1x32xf32>
    %26 = vector.broadcast %25 : vector<1x32xf32> to vector<64x32xf32>
    %27 = arith.addf %24, %26 : vector<64x32xf32>
    %c0_21 = arith.constant 0 : index
    %c0_22 = arith.constant 0 : index
    %28 = vector.load %arg10[%c0_21, %c0_22] : memref<64x32xf32, #tpu.memory_space<vmem>>, vector<64x32xf32>
    tpu.vector_store %arg10[%c0_21, %c0_22], %27 {strides = array<i32>} : memref<64x32xf32, #tpu.memory_space<vmem>>, vector<64x32xf32>,
    return
  }
  func.func @transform_0(%arg0: i32) -> (i32, i32) {
    %c0_i32 = arith.constant 0 : i32
    %c0_i32_0 = arith.constant 0 : i32
    return %arg0, %c0_i32 : i32, i32
  }
  func.func @transform_1(%arg0: i32) -> (i32, i32) {
    %c0_i32 = arith.constant 0 : i32
    %c0_i32_0 = arith.constant 0 : i32
    %c0_i32_1 = arith.constant 0 : i32
    return %c0_i32, %c0_i32_0 : i32, i32
  }
  func.func @transform_2(%arg0: i32) -> (i32, i32) {
    %c0_i32 = arith.constant 0 : i32
    %c0_i32_0 = arith.constant 0 : i32
    %c0_i32_1 = arith.constant 0 : i32
    return %c0_i32, %c0_i32_0 : i32, i32
  }
  func.func @transform_3(%arg0: i32) -> (i32, i32) {
    %c0_i32 = arith.constant 0 : i32
    %c0_i32_0 = arith.constant 0 : i32
    %c0_i32_1 = arith.constant 0 : i32
    return %c0_i32, %c0_i32_0 : i32, i32
  }
  func.func @transform_4(%arg0: i32) -> (i32, i32) {
    %c0_i32 = arith.constant 0 : i32
    %c0_i32_0 = arith.constant 0 : i32
    %c0_i32_1 = arith.constant 0 : i32
    return %c0_i32, %c0_i32_0 : i32, i32
  }
  func.func @transform_5(%arg0: i32) -> (i32, i32) {
    %c0_i32 = arith.constant 0 : i32
    %c0_i32_0 = arith.constant 0 : i32
    %c0_i32_1 = arith.constant 0 : i32
    return %c0_i32, %c0_i32_0 : i32, i32
  }
  func.func @transform_6(%arg0: i32) -> (i32, i32) {
    %c0_i32 = arith.constant 0 : i32
    %c0_i32_0 = arith.constant 0 : i32
    %c0_i32_1 = arith.constant 0 : i32
    return %c0_i32, %c0_i32_0 : i32, i32
  }
  func.func @transform_7(%arg0: i32) -> (i32, i32) {
    %c0_i32 = arith.constant 0 : i32
    %c0_i32_0 = arith.constant 0 : i32
    return %arg0, %c0_i32 : i32, i32
  }
  func.func @transform_8(%arg0: i32) -> (i32, i32) {
    %c0_i32 = arith.constant 0 : i32
    %c0_i32_0 = arith.constant 0 : i32
    return %arg0, %c0_i32 : i32, i32
  }
  func.func @transform_9(%arg0: i32) -> (i32, i32) {
    %c0_i32 = arith.constant 0 : i32
    %c0_i32_0 = arith.constant 0 : i32
    return %arg0, %c0_i32 : i32, i32
  }
}

</mosaic_0001>

<llo_original>
// kernel: tpu_custom_call.1
$region0: #{tpu_custom_call.1}
  #allocation0 [shape = 'u32[]', space=smem, size = 0x4, offset = 0x4, fixed_abs, tag = 'smem constant byte address 0x4 - core index']
  #allocation1 [shape = 'u32[144,128]{1,0:T(1,128)}', space=vmem, size = 0x12000, scoped, tag = 'internal scratch']
  %s0 = inlined_call_operand.vmem [shape: f32[256,32], index: 0, kind: input, shape index: {}]
  %s1 = inlined_call_operand.vmem [shape: f32[32,8], index: 1, kind: input, shape index: {}]
  %s2 = inlined_call_operand.vmem [shape: f32[1,8], index: 2, kind: input, shape index: {}]
  %s3 = inlined_call_operand.vmem [shape: f32[32,32], index: 3, kind: input, shape index: {}]
  %s4 = inlined_call_operand.vmem [shape: f32[1,32], index: 4, kind: input, shape index: {}]
  %s5 = inlined_call_operand.vmem [shape: f32[32,32], index: 5, kind: input, shape index: {}]
  %s6 = inlined_call_operand.vmem [shape: f32[1,32], index: 6, kind: input, shape index: {}]
  %s7 = inlined_call_operand.vmem [shape: f32[256,8], index: 7, kind: output, shape index: {0}]
  %s8 = inlined_call_operand.vmem [shape: f32[256,32], index: 8, kind: output, shape index: {1}]
  %s9 = inlined_call_operand.vmem [shape: f32[256,32], index: 9, kind: output, shape index: {2}]
  %10 = xla_tuple %s7, %s8, %s9
  %s11 = sld [smem:[#allocation0]]
  $region77: #{tpu_custom_call.1} parent=0
    _
  %s13 = ssub.s32 1, %s11
  %s14 = scalar_select 0, %s13, %s11
  loop: start=0, step=1, limit=6
  $region2: #{tpu_custom_call.1} parent=0 // loop_pre_header
    _
  $region3: #{tpu_custom_call.1} parent=0 // loop_header
    %s16 = sphi 0, %s20
    %p17 = scmp.ge.s32.totalorder %s16, 6
    %s26 = sphi 0, %s28
    %s29 = sphi 0, %s26
    %s30 = sphi 0, %s29
    %s46 = sphi 0, %s30
    %s50 = sphi 0, %s50
    %s52 = sphi 0, %s50
    %s53 = sphi 0, %s52
    %s67 = sphi 0, %s53
    %s71 = sphi 0, %s71
    %s73 = sphi 0, %s71
    %s74 = sphi 0, %s73
    %s88 = sphi 0, %s74
    %s92 = sphi 0, %s92
    %s94 = sphi 0, %s92
    %s95 = sphi 0, %s94
    %s109 = sphi 0, %s95
    %s113 = sphi 0, %s113
    %s115 = sphi 0, %s113
    %s116 = sphi 0, %s115
    %s130 = sphi 0, %s116
    %s134 = sphi 0, %s134
    %s136 = sphi 0, %s134
    %s137 = sphi 0, %s136
    %s151 = sphi 0, %s137
    %s155 = sphi 0, %s155
    %s157 = sphi 0, %s155
    %s158 = sphi 0, %s157
    %s172 = sphi 0, %s158
    %s178 = sphi 0, %s180
    %s181 = sphi 0, %s178
    %s182 = sphi 0, %s181
    %s198 = sphi 0, %s182
    %s204 = sphi 0, %s206
    %s207 = sphi 0, %s204
    %s208 = sphi 0, %s207
    %s224 = sphi 0, %s208
    %s230 = sphi 0, %s232
    %s233 = sphi 0, %s230
    %s234 = sphi 0, %s233
    %s250 = sphi 0, %s234
  $region4: #{tpu_custom_call.1} parent=0 // loop_header_branch
    %19 = sbr.rel (%p17) target = $region8
  $region5: #{tpu_custom_call.1} parent=0 // loop_body
    %s21 = ssub.s32 %s16, 1
    %s22 = ssub.s32 %s16, 2
    %s23 = sadd.s32 %s16, 1
    %s24 = ssub.s32 %s16, %s23
    %p25 = scmp.eq.s32.totalorder %s24, 0
    %s27 = sadd.s32 %s26, 1
    %s28 = scalar_select %p25, %s26, %s27
    %p31 = pneg %p25
    %p32 = scmp.eq.s32.totalorder %s16, 3
    %p33 = por %p31, %p32
    %p34 = scmp.ne.s32.totalorder %s26, %s29
    %p35 = scmp.eq.s32.totalorder %s16, 0
    %p36 = por %p34, %p35
    %p37 = scmp.ne.s32.totalorder %s26, %s29
    %p38 = scmp.eq.s32.totalorder %s21, 3
    %p39 = por %p37, %p38
    %p40 = scmp.ne.s32.totalorder %s29, %s30
    %p41 = scmp.eq.s32.totalorder %s21, 0
    %p42 = por %p40, %p41
    %p43 = scmp.ne.s32.totalorder %s29, %s30
    %p44 = scmp.eq.s32.totalorder %s22, 3
    %p45 = por %p43, %p44
    %p47 = scmp.ne.s32.totalorder %s30, %s46
    %p48 = scmp.eq.s32.totalorder %s22, 0
    %p49 = por %p47, %p48
    %s51 = sadd.s32 %s50, 1
    %p54 = scmp.eq.s32.totalorder %s16, 3
    %p55 = scmp.ne.s32.totalorder %s50, %s52
    %p56 = scmp.eq.s32.totalorder %s16, 0
    %p57 = por %p55, %p56
    %p58 = scmp.ne.s32.totalorder %s50, %s52
    %p59 = scmp.eq.s32.totalorder %s21, 3
    %p60 = por %p58, %p59
    %p61 = scmp.ne.s32.totalorder %s52, %s53
    %p62 = scmp.eq.s32.totalorder %s21, 0
    %p63 = por %p61, %p62
    %p64 = scmp.ne.s32.totalorder %s52, %s53
    %p65 = scmp.eq.s32.totalorder %s22, 3
    %p66 = por %p64, %p65
    %p68 = scmp.ne.s32.totalorder %s53, %s67
    %p69 = scmp.eq.s32.totalorder %s22, 0
    %p70 = por %p68, %p69
    %s72 = sadd.s32 %s71, 1
    %p75 = scmp.eq.s32.totalorder %s16, 3
    %p76 = scmp.ne.s32.totalorder %s71, %s73
    %p77 = scmp.eq.s32.totalorder %s16, 0
    %p78 = por %p76, %p77
    %p79 = scmp.ne.s32.totalorder %s71, %s73
    %p80 = scmp.eq.s32.totalorder %s21, 3
    %p81 = por %p79, %p80
    %p82 = scmp.ne.s32.totalorder %s73, %s74
    %p83 = scmp.eq.s32.totalorder %s21, 0
    %p84 = por %p82, %p83
    %p85 = scmp.ne.s32.totalorder %s73, %s74
    %p86 = scmp.eq.s32.totalorder %s22, 3
    %p87 = por %p85, %p86
    %p89 = scmp.ne.s32.totalorder %s74, %s88
    %p90 = scmp.eq.s32.totalorder %s22, 0
    %p91 = por %p89, %p90
    %s93 = sadd.s32 %s92, 1
    %p96 = scmp.eq.s32.totalorder %s16, 3
    %p97 = scmp.ne.s32.totalorder %s92, %s94
    %p98 = scmp.eq.s32.totalorder %s16, 0
    %p99 = por %p97, %p98
    %p100 = scmp.ne.s32.totalorder %s92, %s94
    %p101 = scmp.eq.s32.totalorder %s21, 3
    %p102 = por %p100, %p101
    %p103 = scmp.ne.s32.totalorder %s94, %s95
    %p104 = scmp.eq.s32.totalorder %s21, 0
    %p105 = por %p103, %p104
    %p106 = scmp.ne.s32.totalorder %s94, %s95
    %p107 = scmp.eq.s32.totalorder %s22, 3
    %p108 = por %p106, %p107
    %p110 = scmp.ne.s32.totalorder %s95, %s109
    %p111 = scmp.eq.s32.totalorder %s22, 0
    %p112 = por %p110, %p111
    %s114 = sadd.s32 %s113, 1
    %p117 = scmp.eq.s32.totalorder %s16, 3
    %p118 = scmp.ne.s32.totalorder %s113, %s115
    %p119 = scmp.eq.s32.totalorder %s16, 0
    %p120 = por %p118, %p119
    %p121 = scmp.ne.s32.totalorder %s113, %s115
    %p122 = scmp.eq.s32.totalorder %s21, 3
    %p123 = por %p121, %p122
    %p124 = scmp.ne.s32.totalorder %s115, %s116
    %p125 = scmp.eq.s32.totalorder %s21, 0
    %p126 = por %p124, %p125
    %p127 = scmp.ne.s32.totalorder %s115, %s116
    %p128 = scmp.eq.s32.totalorder %s22, 3
    %p129 = por %p127, %p128
    %p131 = scmp.ne.s32.totalorder %s116, %s130
    %p132 = scmp.eq.s32.totalorder %s22, 0
    %p133 = por %p131, %p132
    %s135 = sadd.s32 %s134, 1
    %p138 = scmp.eq.s32.totalorder %s16, 3
    %p139 = scmp.ne.s32.totalorder %s134, %s136
    %p140 = scmp.eq.s32.totalorder %s16, 0
    %p141 = por %p139, %p140
    %p142 = scmp.ne.s32.totalorder %s134, %s136
    %p143 = scmp.eq.s32.totalorder %s21, 3
    %p144 = por %p142, %p143
    %p145 = scmp.ne.s32.totalorder %s136, %s137
    %p146 = scmp.eq.s32.totalorder %s21, 0
    %p147 = por %p145, %p146
    %p148 = scmp.ne.s32.totalorder %s136, %s137
    %p149 = scmp.eq.s32.totalorder %s22, 3
    %p150 = por %p148, %p149
    %p152 = scmp.ne.s32.totalorder %s137, %s151
    %p153 = scmp.eq.s32.totalorder %s22, 0
    %p154 = por %p152, %p153
    %s156 = sadd.s32 %s155, 1
    %p159 = scmp.eq.s32.totalorder %s16, 3
    %p160 = scmp.ne.s32.totalorder %s155, %s157
    %p161 = scmp.eq.s32.totalorder %s16, 0
    %p162 = por %p160, %p161
    %p163 = scmp.ne.s32.totalorder %s155, %s157
    %p164 = scmp.eq.s32.totalorder %s21, 3
    %p165 = por %p163, %p164
    %p166 = scmp.ne.s32.totalorder %s157, %s158
    %p167 = scmp.eq.s32.totalorder %s21, 0
    %p168 = por %p166, %p167
    %p169 = scmp.ne.s32.totalorder %s157, %s158
    %p170 = scmp.eq.s32.totalorder %s22, 3
    %p171 = por %p169, %p170
    %p173 = scmp.ne.s32.totalorder %s158, %s172
    %p174 = scmp.eq.s32.totalorder %s22, 0
    %p175 = por %p173, %p174
    %s176 = ssub.s32 %s16, %s23
    %p177 = scmp.eq.s32.totalorder %s176, 0
    %s179 = sadd.s32 %s178, 1
    %s180 = scalar_select %p177, %s178, %s179
    %p183 = pneg %p177
    %p184 = scmp.eq.s32.totalorder %s16, 3
    %p185 = por %p183, %p184
    %p186 = scmp.ne.s32.totalorder %s178, %s181
    %p187 = scmp.eq.s32.totalorder %s16, 0
    %p188 = por %p186, %p187
    %p189 = scmp.ne.s32.totalorder %s178, %s181
    %p190 = scmp.eq.s32.totalorder %s21, 3
    %p191 = por %p189, %p190
    %p192 = scmp.ne.s32.totalorder %s181, %s182
    %p193 = scmp.eq.s32.totalorder %s21, 0
    %p194 = por %p192, %p193
    %p195 = scmp.ne.s32.totalorder %s181, %s182
    %p196 = scmp.eq.s32.totalorder %s22, 3
    %p197 = por %p195, %p196
    %p199 = scmp.ne.s32.totalorder %s182, %s198
    %p200 = scmp.eq.s32.totalorder %s22, 0
    %p201 = por %p199, %p200
    %s202 = ssub.s32 %s16, %s23
    %p203 = scmp.eq.s32.totalorder %s202, 0
    %s205 = sadd.s32 %s204, 1
    %s206 = scalar_select %p203, %s204, %s205
    %p209 = pneg %p203
    %p210 = scmp.eq.s32.totalorder %s16, 3
    %p211 = por %p209, %p210
    %p212 = scmp.ne.s32.totalorder %s204, %s207
    %p213 = scmp.eq.s32.totalorder %s16, 0
    %p214 = por %p212, %p213
    %p215 = scmp.ne.s32.totalorder %s204, %s207
    %p216 = scmp.eq.s32.totalorder %s21, 3
    %p217 = por %p215, %p216
    %p218 = scmp.ne.s32.totalorder %s207, %s208
    %p219 = scmp.eq.s32.totalorder %s21, 0
    %p220 = por %p218, %p219
    %p221 = scmp.ne.s32.totalorder %s207, %s208
    %p222 = scmp.eq.s32.totalorder %s22, 3
    %p223 = por %p221, %p222
    %p225 = scmp.ne.s32.totalorder %s208, %s224
    %p226 = scmp.eq.s32.totalorder %s22, 0
    %p227 = por %p225, %p226
    %s228 = ssub.s32 %s16, %s23
    %p229 = scmp.eq.s32.totalorder %s228, 0
    %s231 = sadd.s32 %s230, 1
    %s232 = scalar_select %p229, %s230, %s231
    %p235 = pneg %p229
    %p236 = scmp.eq.s32.totalorder %s16, 3
    %p237 = por %p235, %p236
    %p238 = scmp.ne.s32.totalorder %s230, %s233
    %p239 = scmp.eq.s32.totalorder %s16, 0
    %p240 = por %p238, %p239
    %p241 = scmp.ne.s32.totalorder %s230, %s233
    %p242 = scmp.eq.s32.totalorder %s21, 3
    %p243 = por %p241, %p242
    %p244 = scmp.ne.s32.totalorder %s233, %s234
    %p245 = scmp.eq.s32.totalorder %s21, 0
    %p246 = por %p244, %p245
    %p247 = scmp.ne.s32.totalorder %s233, %s234
    %p248 = scmp.eq.s32.totalorder %s22, 3
    %p249 = por %p247, %p248
    %p251 = scmp.ne.s32.totalorder %s234, %s250
    %p252 = scmp.eq.s32.totalorder %s22, 0
    %p253 = por %p251, %p252
    %p254 = scmp.le.s32.totalorder 1, %s16
    %p255 = scmp.lt.s32.totalorder %s16, 5
    %p256 = pnand %p254, %p255
    %p257 = pneg %p256
    // Predicated region
    $region9: #{tpu_custom_call.1} parent=5 // pred_check
      _
    $region10: #{tpu_custom_call.1} parent=5 // pred_check_branch
      %259 = sbr.rel (%p256) target = $region12
    $region11: #{tpu_custom_call.1} parent=5 // pred_region
      %s260 = ssub.s32 %s16, 1
      // Predicated region
      $region13: #{tpu_custom_call.1} parent=11 // pred_check
        %p261 = pneg %p63
      $region14: #{tpu_custom_call.1} parent=11 // pred_check_branch
        %263 = sbr.rel (%p261) target = $region16
      $region15: #{tpu_custom_call.1} parent=11 // pred_region
        _
      $region16: #{tpu_custom_call.1} parent=11 // pred_fallthru
        _
      // Predicated region
      $region17: #{tpu_custom_call.1} parent=11 // pred_check
        %p264 = pneg %p84
      $region18: #{tpu_custom_call.1} parent=11 // pred_check_branch
        %266 = sbr.rel (%p264) target = $region20
      $region19: #{tpu_custom_call.1} parent=11 // pred_region
        _
      $region20: #{tpu_custom_call.1} parent=11 // pred_fallthru
        _
      // Predicated region
      $region21: #{tpu_custom_call.1} parent=11 // pred_check
        %p267 = pneg %p105
      $region22: #{tpu_custom_call.1} parent=11 // pred_check_branch
        %269 = sbr.rel (%p267) target = $region24
      $region23: #{tpu_custom_call.1} parent=11 // pred_region
        _
      $region24: #{tpu_custom_call.1} parent=11 // pred_fallthru
        _
      // Predicated region
      $region25: #{tpu_custom_call.1} parent=11 // pred_check
        %p270 = pneg %p126
      $region26: #{tpu_custom_call.1} parent=11 // pred_check_branch
        %272 = sbr.rel (%p270) target = $region28
      $region27: #{tpu_custom_call.1} parent=11 // pred_region
        _
      $region28: #{tpu_custom_call.1} parent=11 // pred_fallthru
        _
      // Predicated region
      $region29: #{tpu_custom_call.1} parent=11 // pred_check
        %p273 = pneg %p147
      $region30: #{tpu_custom_call.1} parent=11 // pred_check_branch
        %275 = sbr.rel (%p273) target = $region32
      $region31: #{tpu_custom_call.1} parent=11 // pred_region
        _
      $region32: #{tpu_custom_call.1} parent=11 // pred_fallthru
        _
      // Predicated region
      $region33: #{tpu_custom_call.1} parent=11 // pred_check
        %p276 = pneg %p168
      $region34: #{tpu_custom_call.1} parent=11 // pred_check_branch
        %278 = sbr.rel (%p276) target = $region36
      $region35: #{tpu_custom_call.1} parent=11 // pred_region
        _
      $region36: #{tpu_custom_call.1} parent=11 // pred_fallthru
        _
    $region12: #{tpu_custom_call.1} parent=5 // pred_fallthru
      _
    %p279 = scmp.lt.s32.totalorder %s16, 4
    // Predicated region
    $region37: #{tpu_custom_call.1} parent=5 // pred_check
      %p280 = pneg %p279
    $region38: #{tpu_custom_call.1} parent=5 // pred_check_branch
      %282 = sbr.rel (%p280) target = $region40
    $region39: #{tpu_custom_call.1} parent=5 // pred_region
      // Predicated region
      $region41: #{tpu_custom_call.1} parent=39 // pred_check
        %p283 = pneg %p36
      $region42: #{tpu_custom_call.1} parent=39 // pred_check_branch
        %285 = sbr.rel (%p283) target = $region44
      $region43: #{tpu_custom_call.1} parent=39 // pred_region
        %s286 = smul.u32 8, %s16
        %p287 = scmp.lt.s32.totalorder %s286, 31
        %s288 = scalar_select %p287, %s286, 31
        %s289 = smul.addr %s288, 8
        %s290 = scalar_lea.vmem %s0, %s289
        %s291 = smul.u32 8, %s16
      $region44: #{tpu_custom_call.1} parent=39 // pred_fallthru
        _
    $region40: #{tpu_custom_call.1} parent=5 // pred_fallthru
      _
    %p292 = scmp.le.s32.totalorder 1, %s16
    %p293 = scmp.lt.s32.totalorder %s16, 5
    %p294 = pnand %p292, %p293
    %p295 = pneg %p294
    // Predicated region
    $region45: #{tpu_custom_call.1} parent=5 // pred_check
      _
    $region46: #{tpu_custom_call.1} parent=5 // pred_check_branch
      %297 = sbr.rel (%p294) target = $region48
    $region47: #{tpu_custom_call.1} parent=5 // pred_region
      %s298 = ssub.s32 %s16, 1
      %s299 = smul.u32 8, %s21
      %p300 = scmp.lt.s32.totalorder %s299, 31
      %s301 = scalar_select %p300, %s299, 31
      %s302 = smul.addr %s301, 8
      %s303 = scalar_lea.vmem %s0, %s302
      %p304 = pneg %p42
      %p305 = pneg %p39
      %p306 = pneg %p63
      %p307 = pneg %p60
      %p308 = pneg %p84
      %p309 = pneg %p81
      %p310 = pneg %p105
      %p311 = pneg %p102
      %p312 = pneg %p126
      %p313 = pneg %p123
      %p314 = pneg %p147
      %p315 = pneg %p144
      %p316 = pneg %p168
      %p317 = pneg %p165
      %p318 = pneg %p194
      %p319 = pneg %p191
      %s320 = smul.u32 8, %s21
      %p321 = scmp.lt.s32.totalorder %s320, 31
      %s322 = scalar_select %p321, %s320, 31
      %s323 = smul.addr %s322, 8
      %s324 = scalar_lea.vmem %s7, %s323
      %p325 = pneg %p220
      %p326 = pneg %p217
      %s327 = smul.u32 8, %s21
      %p328 = scmp.lt.s32.totalorder %s327, 31
      %s329 = scalar_select %p328, %s327, 31
      %s330 = smul.addr %s329, 8
      %s331 = scalar_lea.vmem %s8, %s330
      %p332 = pneg %p246
      %p333 = pneg %p243
      %s334 = smul.u32 8, %s21
      %p335 = scmp.lt.s32.totalorder %s334, 31
      %s336 = scalar_select %p335, %s334, 31
      %s337 = smul.addr %s336, 8
      %s338 = scalar_lea.vmem %s9, %s337
      %s339 = smul.u32 8, %s21
      %p340 = scmp.lt.s32.totalorder %s339, 31
      %s341 = scalar_select %p340, %s339, 31
      %s342 = smul.addr %s341, 8
      %s343 = scalar_lea.vmem %s0, %s342
      %s344 = smul.u32 8, %s21
      %s345 = smul.u32 8, %s21
      %p346 = scmp.lt.s32.totalorder %s345, 31
      %s347 = scalar_select %p346, %s345, 31
      %s348 = smul.addr %s347, 8
      %s349 = scalar_lea.vmem %s7, %s348
      %s350 = smul.u32 8, %s21
      %s351 = smul.u32 8, %s21
      %p352 = scmp.lt.s32.totalorder %s351, 31
      %s353 = scalar_select %p352, %s351, 31
      %s354 = smul.addr %s353, 8
      %s355 = scalar_lea.vmem %s8, %s354
      %s356 = smul.u32 8, %s21
      %s357 = smul.u32 8, %s21
      %p358 = scmp.lt.s32.totalorder %s357, 31
      %s359 = scalar_select %p358, %s357, 31
      %s360 = smul.addr %s359, 8
      %s361 = scalar_lea.vmem %s9, %s360
      %s362 = smul.u32 8, %s21
      %v363 = vld [vmem:[%s343] sm:$0xff]
      %v364 = vld [vmem:[%s343 + $0x8] sm:$0xff]
      %v365 = vld [vmem:[%s343 + $0x10] sm:$0xff]
      %v366 = vld [vmem:[%s343 + $0x18] sm:$0xff]
      %v367 = vld [vmem:[%s343 + $0x20] sm:$0xff]
      %v368 = vld [vmem:[%s343 + $0x28] sm:$0xff]
      %v369 = vld [vmem:[%s343 + $0x30] sm:$0xff]
      %v370 = vld [vmem:[%s343 + $0x38] sm:$0xff]
      %v371 = vld [vmem:[%s1] sm:$0xff]
      %v372 = vld [vmem:[%s1 + $0x8] sm:$0xff]
      %v373 = vld [vmem:[%s1 + $0x10] sm:$0xff]
      %v374 = vld [vmem:[%s1 + $0x18] sm:$0xff]
      %v375 = vld [vmem:[%s2] sm:$0x1]
      %v377 = vlaneseq
      %v378 = vshrl.u32 %v377, 7
      %v379 = vsub.s32 0, %v378
      %v380 = vrot.slane %v375, %v379
      %vm382 = vcmask 261120
      %v384 = vsel %vm382, %v363, 0
      %v387 = vsel %vm382, %v364, 0
      %v390 = vsel %vm382, %v365, 0
      %v393 = vsel %vm382, %v366, 0
      %v396 = vsel %vm382, %v367, 0
      %v399 = vsel %vm382, %v368, 0
      %v402 = vsel %vm382, %v369, 0
      %v405 = vsel %vm382, %v370, 0
      %407 = vmatprep.subr.mxu0 0.0
      %408 = vmatpush1.msra.mxu0 0.0
      %409 = vmatprep.subr.mxu0 0.0
      %410 = vmatpush1.msra.mxu0 0.0
      %411 = vmatprep.subr.mxu0 0.0
      %412 = vmatpush1.msra.mxu0 0.0
      %413 = vmatprep.subr.mxu0 0.0
      %414 = vmatpush1.msra.mxu0 0.0
      %415 = vmatprep.subr.mxu0 0.0
      %416 = vmatpush1.msra.mxu0 0.0
      %417 = vmatprep.subr.mxu0 0.0
      %418 = vmatpush1.msra.mxu0 0.0
      %419 = vmatprep.subr.mxu0 0.0
      %420 = vmatpush1.msra.mxu0 0.0
      %421 = vmatprep.subr.mxu0 0.0
      %422 = vmatpush1.msra.mxu0 0.0
      %423 = vmatprep.subr.mxu0 0.0
      %424 = vmatpush1.msra.mxu0 0.0
      %425 = vmatprep.subr.mxu0 0.0
      %426 = vmatpush1.msra.mxu0 0.0
      %427 = vmatprep.subr.mxu0 0.0
      %428 = vmatpush1.msra.mxu0 0.0
      %429 = vmatprep.subr.mxu0 0.0
      %430 = vmatpush1.msra.mxu0 0.0
      %431 = vmatprep.subr.mxu0 0.0
      %432 = vmatpush1.msra.mxu0 %v374
      %433 = vmatprep.subr.mxu0 0.0
      %434 = vmatpush1.msra.mxu0 %v373
      %435 = vmatprep.subr.mxu0 0.0
      %436 = vmatpush1.msra.mxu0 %v372
      %437 = vmatprep.subr.mxu0 0.0
      %438 = vmatpush1.msra.mxu0 %v371
      %439 = vmatprep.subr.mxu0 0.0
      %440 = vmatpush2.msra.mxu0 0.0
      %441 = vmatprep.subr.mxu0 0.0
      %442 = vmatpush2.msra.mxu0 0.0
      %443 = vmatprep.subr.mxu0 0.0
      %444 = vmatpush2.msra.mxu0 0.0
      %445 = vmatprep.subr.mxu0 0.0
      %446 = vmatpush2.msra.mxu0 0.0
      %447 = vmatprep.subr.mxu0 0.0
      %448 = vmatpush2.msra.mxu0 0.0
      %449 = vmatprep.subr.mxu0 0.0
      %450 = vmatpush2.msra.mxu0 0.0
      %451 = vmatprep.subr.mxu0 0.0
      %452 = vmatpush2.msra.mxu0 0.0
      %453 = vmatprep.subr.mxu0 0.0
      %454 = vmatpush2.msra.mxu0 0.0
      %455 = vmatprep.subr.mxu0 0.0
      %456 = vmatpush2.msra.mxu0 0.0
      %457 = vmatprep.subr.mxu0 0.0
      %458 = vmatpush2.msra.mxu0 0.0
      %459 = vmatprep.subr.mxu0 0.0
      %460 = vmatpush2.msra.mxu0 0.0
      %461 = vmatprep.subr.mxu0 0.0
      %462 = vmatpush2.msra.mxu0 0.0
      %463 = vmatprep.subr.mxu0 0.0
      %464 = vmatpush2.msra.mxu0 0.0
      %465 = vmatprep.subr.mxu0 0.0
      %466 = vmatpush2.msra.mxu0 0.0
      %467 = vmatprep.subr.mxu0 0.0
      %468 = vmatpush2.msra.mxu0 0.0
      %469 = vmatprep.subr.mxu0 0.0
      %470 = vmatpush2.msra.mxu0 0.0
      %471 = vmatprep.mubr.f32.mxu0 0.0
      %472 = vmatmul.mubr.f32.gmra.mxu0 %v384
      %v473 = vpop.f32.mrf.mxu0
      %v474 = vadd.f32 %v380, %v473
      %v475 = vpop.f32.mrf.mxu0
      %476 = vmatprep.mubr.f32.mxu0 0.0
      %477 = vmatmul.mubr.f32.gmra.mxu0 %v387
      %v478 = vpop.f32.mrf.mxu0
      %v479 = vadd.f32 %v380, %v478
      %v480 = vpop.f32.mrf.mxu0
      %481 = vmatprep.mubr.f32.mxu0 0.0
      %482 = vmatmul.mubr.f32.gmra.mxu0 %v390
      %v483 = vpop.f32.mrf.mxu0
      %v484 = vadd.f32 %v380, %v483
      %v485 = vpop.f32.mrf.mxu0
      %486 = vmatprep.mubr.f32.mxu0 0.0
      %487 = vmatmul.mubr.f32.gmra.mxu0 %v393
      %v488 = vpop.f32.mrf.mxu0
      %v489 = vadd.f32 %v380, %v488
      %v490 = vpop.f32.mrf.mxu0
      %491 = vmatprep.mubr.f32.mxu0 0.0
      %492 = vmatmul.mubr.f32.gmra.mxu0 %v396
      %v493 = vpop.f32.mrf.mxu0
      %v494 = vadd.f32 %v380, %v493
      %v495 = vpop.f32.mrf.mxu0
      %496 = vmatprep.mubr.f32.mxu0 0.0
      %497 = vmatmul.mubr.f32.gmra.mxu0 %v399
      %v498 = vpop.f32.mrf.mxu0
      %v499 = vadd.f32 %v380, %v498
      %v500 = vpop.f32.mrf.mxu0
      %501 = vmatprep.mubr.f32.mxu0 0.0
      %502 = vmatmul.mubr.f32.gmra.mxu0 %v402
      %v503 = vpop.f32.mrf.mxu0
      %v504 = vadd.f32 %v380, %v503
      %v505 = vpop.f32.mrf.mxu0
      %506 = vmatprep.mubr.f32.mxu0 0.0
      %507 = vmatmul.mubr.f32.gmra.mxu0 %v405
      %v508 = vpop.f32.mrf.mxu0
      %v509 = vadd.f32 %v380, %v508
      %v510 = vpop.f32.mrf.mxu0
      %511 = vdwg.mxu0
      %vm512 = vcmask 64512
      %v513 = vsel %vm512, %v474, -inf
      %514 = vmax.xlane.f32.xlu0 %v513
      %v515 = vpop.xlane.xlu0 %514
      %v516 = vsel %vm512, %v479, -inf
      %517 = vmax.xlane.f32.xlu0 %v516
      %v518 = vpop.xlane.xlu0 %517
      %v519 = vsel %vm512, %v484, -inf
      %520 = vmax.xlane.f32.xlu0 %v519
      %v521 = vpop.xlane.xlu0 %520
      %v522 = vsel %vm512, %v489, -inf
      %523 = vmax.xlane.f32.xlu0 %v522
      %v524 = vpop.xlane.xlu0 %523
      %v525 = vsel %vm512, %v494, -inf
      %526 = vmax.xlane.f32.xlu0 %v525
      %v527 = vpop.xlane.xlu0 %526
      %v528 = vsel %vm512, %v499, -inf
      %529 = vmax.xlane.f32.xlu0 %v528
      %v530 = vpop.xlane.xlu0 %529
      %v531 = vsel %vm512, %v504, -inf
      %532 = vmax.xlane.f32.xlu0 %v531
      %v533 = vpop.xlane.xlu0 %532
      %v534 = vsel %vm512, %v509, -inf
      %535 = vmax.xlane.f32.xlu0 %v534
      %v536 = vpop.xlane.xlu0 %535
      %v537 = vsub.f32 %v474, %v515
      %v538 = vsub.f32 %v479, %v518
      %v539 = vsub.f32 %v484, %v521
      %v540 = vsub.f32 %v489, %v524
      %v541 = vsub.f32 %v494, %v527
      %v542 = vsub.f32 %v499, %v530
      %v543 = vsub.f32 %v504, %v533
      %v544 = vsub.f32 %v509, %v536
      %v545 = vmul.f32 %v537, 1.442695
      %v546 = vpow.pop %v545
      %v547 = vmul.f32 %v538, 1.442695
      %v548 = vpow.pop %v547
      %v549 = vmul.f32 %v539, 1.442695
      %v550 = vpow.pop %v549
      %v551 = vmul.f32 %v540, 1.442695
      %v552 = vpow.pop %v551
      %v553 = vmul.f32 %v541, 1.442695
      %v554 = vpow.pop %v553
      %v555 = vmul.f32 %v542, 1.442695
      %v556 = vpow.pop %v555
      %v557 = vmul.f32 %v543, 1.442695
      %v558 = vpow.pop %v557
      %v559 = vmul.f32 %v544, 1.442695
      %v560 = vpow.pop %v559
      %v561 = vsel %vm512, %v546, 0.0
      %562 = vadd.xlane.f32.xlu0 %v561
      %v563 = vpop.xlane.xlu0 %562
      %v564 = vsel %vm512, %v548, 0.0
      %565 = vadd.xlane.f32.xlu0 %v564
      %v566 = vpop.xlane.xlu0 %565
      %v567 = vsel %vm512, %v550, 0.0
      %568 = vadd.xlane.f32.xlu0 %v567
      %v569 = vpop.xlane.xlu0 %568
      %v570 = vsel %vm512, %v552, 0.0
      %571 = vadd.xlane.f32.xlu0 %v570
      %v572 = vpop.xlane.xlu0 %571
      %v573 = vsel %vm512, %v554, 0.0
      %574 = vadd.xlane.f32.xlu0 %v573
      %v575 = vpop.xlane.xlu0 %574
      %v576 = vsel %vm512, %v556, 0.0
      %577 = vadd.xlane.f32.xlu0 %v576
      %v578 = vpop.xlane.xlu0 %577
      %v579 = vsel %vm512, %v558, 0.0
      %580 = vadd.xlane.f32.xlu0 %v579
      %v581 = vpop.xlane.xlu0 %580
      %v582 = vsel %vm512, %v560, 0.0
      %583 = vadd.xlane.f32.xlu0 %v582
      %v584 = vpop.xlane.xlu0 %583
      %v585 = vrcp.pop %v563
      %v586 = vmul.f32 %v546, %v585
      %v587 = vrcp.pop %v566
      %v588 = vmul.f32 %v548, %v587
      %v589 = vrcp.pop %v569
      %v590 = vmul.f32 %v550, %v589
      %v591 = vrcp.pop %v572
      %v592 = vmul.f32 %v552, %v591
      %v593 = vrcp.pop %v575
      %v594 = vmul.f32 %v554, %v593
      %v595 = vrcp.pop %v578
      %v596 = vmul.f32 %v556, %v595
      %v597 = vrcp.pop %v581
      %v598 = vmul.f32 %v558, %v597
      %v599 = vrcp.pop %v584
      %v600 = vmul.f32 %v560, %v599
      %601 = vst.msk [vmem:[%s349] sm:$0xff] %vm512, %v586
      %602 = vst.msk [vmem:[%s349 + $0x8] sm:$0xff] %vm512, %v588
      %603 = vst.msk [vmem:[%s349 + $0x10] sm:$0xff] %vm512, %v590
      %604 = vst.msk [vmem:[%s349 + $0x18] sm:$0xff] %vm512, %v592
      %605 = vst.msk [vmem:[%s349 + $0x20] sm:$0xff] %vm512, %v594
      %606 = vst.msk [vmem:[%s349 + $0x28] sm:$0xff] %vm512, %v596
      %607 = vst.msk [vmem:[%s349 + $0x30] sm:$0xff] %vm512, %v598
      %608 = vst.msk [vmem:[%s349 + $0x38] sm:$0xff] %vm512, %v600
      %v609 = vld [vmem:[%s3] sm:$0xff]
      %v610 = vld [vmem:[%s3 + $0x8] sm:$0xff]
      %v611 = vld [vmem:[%s3 + $0x10] sm:$0xff]
      %v612 = vld [vmem:[%s3 + $0x18] sm:$0xff]
      %v613 = vld [vmem:[%s4] sm:$0x1]
      %v615 = vlaneseq
      %v616 = vshrl.u32 %v615, 7
      %v617 = vsub.s32 0, %v616
      %v618 = vrot.slane %v613, %v617
      %620 = vmatprep.subr.mxu0 0.0
      %621 = vmatpush1.msra.mxu0 0.0
      %622 = vmatprep.subr.mxu0 0.0
      %623 = vmatpush1.msra.mxu0 0.0
      %624 = vmatprep.subr.mxu0 0.0
      %625 = vmatpush1.msra.mxu0 0.0
      %626 = vmatprep.subr.mxu0 0.0
      %627 = vmatpush1.msra.mxu0 0.0
      %628 = vmatprep.subr.mxu0 0.0
      %629 = vmatpush1.msra.mxu0 0.0
      %630 = vmatprep.subr.mxu0 0.0
      %631 = vmatpush1.msra.mxu0 0.0
      %632 = vmatprep.subr.mxu0 0.0
      %633 = vmatpush1.msra.mxu0 0.0
      %634 = vmatprep.subr.mxu0 0.0
      %635 = vmatpush1.msra.mxu0 0.0
      %636 = vmatprep.subr.mxu0 0.0
      %637 = vmatpush1.msra.mxu0 0.0
      %638 = vmatprep.subr.mxu0 0.0
      %639 = vmatpush1.msra.mxu0 0.0
      %640 = vmatprep.subr.mxu0 0.0
      %641 = vmatpush1.msra.mxu0 0.0
      %642 = vmatprep.subr.mxu0 0.0
      %643 = vmatpush1.msra.mxu0 0.0
      %644 = vmatprep.subr.mxu0 0.0
      %645 = vmatpush1.msra.mxu0 %v612
      %646 = vmatprep.subr.mxu0 0.0
      %647 = vmatpush1.msra.mxu0 %v611
      %648 = vmatprep.subr.mxu0 0.0
      %649 = vmatpush1.msra.mxu0 %v610
      %650 = vmatprep.subr.mxu0 0.0
      %651 = vmatpush1.msra.mxu0 %v609
      %652 = vmatprep.subr.mxu0 0.0
      %653 = vmatpush2.msra.mxu0 0.0
      %654 = vmatprep.subr.mxu0 0.0
      %655 = vmatpush2.msra.mxu0 0.0
      %656 = vmatprep.subr.mxu0 0.0
      %657 = vmatpush2.msra.mxu0 0.0
      %658 = vmatprep.subr.mxu0 0.0
      %659 = vmatpush2.msra.mxu0 0.0
      %660 = vmatprep.subr.mxu0 0.0
      %661 = vmatpush2.msra.mxu0 0.0
      %662 = vmatprep.subr.mxu0 0.0
      %663 = vmatpush2.msra.mxu0 0.0
      %664 = vmatprep.subr.mxu0 0.0
      %665 = vmatpush2.msra.mxu0 0.0
      %666 = vmatprep.subr.mxu0 0.0
      %667 = vmatpush2.msra.mxu0 0.0
      %668 = vmatprep.subr.mxu0 0.0
      %669 = vmatpush2.msra.mxu0 0.0
      %670 = vmatprep.subr.mxu0 0.0
      %671 = vmatpush2.msra.mxu0 0.0
      %672 = vmatprep.subr.mxu0 0.0
      %673 = vmatpush2.msra.mxu0 0.0
      %674 = vmatprep.subr.mxu0 0.0
      %675 = vmatpush2.msra.mxu0 0.0
      %676 = vmatprep.subr.mxu0 0.0
      %677 = vmatpush2.msra.mxu0 0.0
      %678 = vmatprep.subr.mxu0 0.0
      %679 = vmatpush2.msra.mxu0 0.0
      %680 = vmatprep.subr.mxu0 0.0
      %681 = vmatpush2.msra.mxu0 0.0
      %682 = vmatprep.subr.mxu0 0.0
      %683 = vmatpush2.msra.mxu0 0.0
      %684 = vmatprep.mubr.f32.mxu0 0.0
      %685 = vmatmul.mubr.f32.gmra.mxu0 %v384
      %v686 = vpop.f32.mrf.mxu0
      %v687 = vadd.f32 %v618, %v686
      %v688 = vpop.f32.mrf.mxu0
      %689 = vmatprep.mubr.f32.mxu0 0.0
      %690 = vmatmul.mubr.f32.gmra.mxu0 %v387
      %v691 = vpop.f32.mrf.mxu0
      %v692 = vadd.f32 %v618, %v691
      %v693 = vpop.f32.mrf.mxu0
      %694 = vmatprep.mubr.f32.mxu0 0.0
      %695 = vmatmul.mubr.f32.gmra.mxu0 %v390
      %v696 = vpop.f32.mrf.mxu0
      %v697 = vadd.f32 %v618, %v696
      %v698 = vpop.f32.mrf.mxu0
      %699 = vmatprep.mubr.f32.mxu0 0.0
      %700 = vmatmul.mubr.f32.gmra.mxu0 %v393
      %v701 = vpop.f32.mrf.mxu0
      %v702 = vadd.f32 %v618, %v701
      %v703 = vpop.f32.mrf.mxu0
      %704 = vmatprep.mubr.f32.mxu0 0.0
      %705 = vmatmul.mubr.f32.gmra.mxu0 %v396
      %v706 = vpop.f32.mrf.mxu0
      %v707 = vadd.f32 %v618, %v706
      %v708 = vpop.f32.mrf.mxu0
      %709 = vmatprep.mubr.f32.mxu0 0.0
      %710 = vmatmul.mubr.f32.gmra.mxu0 %v399
      %v711 = vpop.f32.mrf.mxu0
      %v712 = vadd.f32 %v618, %v711
      %v713 = vpop.f32.mrf.mxu0
      %714 = vmatprep.mubr.f32.mxu0 0.0
      %715 = vmatmul.mubr.f32.gmra.mxu0 %v402
      %v716 = vpop.f32.mrf.mxu0
      %v717 = vadd.f32 %v618, %v716
      %v718 = vpop.f32.mrf.mxu0
      %719 = vmatprep.mubr.f32.mxu0 0.0
      %720 = vmatmul.mubr.f32.gmra.mxu0 %v405
      %v721 = vpop.f32.mrf.mxu0
      %v722 = vadd.f32 %v618, %v721
      %v723 = vpop.f32.mrf.mxu0
      %724 = vdwg.mxu0
      %v725 = vmul.f32 %v687, 1.442695
      %v726 = vpow.pop %v725
      %v727 = vmul.f32 %v692, 1.442695
      %v728 = vpow.pop %v727
      %v729 = vmul.f32 %v697, 1.442695
      %v730 = vpow.pop %v729
      %v731 = vmul.f32 %v702, 1.442695
      %v732 = vpow.pop %v731
      %v733 = vmul.f32 %v707, 1.442695
      %v734 = vpow.pop %v733
      %v735 = vmul.f32 %v712, 1.442695
      %v736 = vpow.pop %v735
      %v737 = vmul.f32 %v717, 1.442695
      %v738 = vpow.pop %v737
      %v739 = vmul.f32 %v722, 1.442695
      %v740 = vpow.pop %v739
      %741 = vst.msk [vmem:[%s355] sm:$0xff] %vm382, %v726
      %742 = vst.msk [vmem:[%s355 + $0x8] sm:$0xff] %vm382, %v728
      %743 = vst.msk [vmem:[%s355 + $0x10] sm:$0xff] %vm382, %v730
      %744 = vst.msk [vmem:[%s355 + $0x18] sm:$0xff] %vm382, %v732
      %745 = vst.msk [vmem:[%s355 + $0x20] sm:$0xff] %vm382, %v734
      %746 = vst.msk [vmem:[%s355 + $0x28] sm:$0xff] %vm382, %v736
      %747 = vst.msk [vmem:[%s355 + $0x30] sm:$0xff] %vm382, %v738
      %748 = vst.msk [vmem:[%s355 + $0x38] sm:$0xff] %vm382, %v740
      %v749 = vld [vmem:[%s5] sm:$0xff]
      %v750 = vld [vmem:[%s5 + $0x8] sm:$0xff]
      %v751 = vld [vmem:[%s5 + $0x10] sm:$0xff]
      %v752 = vld [vmem:[%s5 + $0x18] sm:$0xff]
      %v753 = vld [vmem:[%s6] sm:$0x1]
      %v755 = vlaneseq
      %v756 = vshrl.u32 %v755, 7
      %v757 = vsub.s32 0, %v756
      %v758 = vrot.slane %v753, %v757
      %760 = vmatprep.subr.mxu0 0.0
      %761 = vmatpush1.msra.mxu0 0.0
      %762 = vmatprep.subr.mxu0 0.0
      %763 = vmatpush1.msra.mxu0 0.0
      %764 = vmatprep.subr.mxu0 0.0
      %765 = vmatpush1.msra.mxu0 0.0
      %766 = vmatprep.subr.mxu0 0.0
      %767 = vmatpush1.msra.mxu0 0.0
      %768 = vmatprep.subr.mxu0 0.0
      %769 = vmatpush1.msra.mxu0 0.0
      %770 = vmatprep.subr.mxu0 0.0
      %771 = vmatpush1.msra.mxu0 0.0
      %772 = vmatprep.subr.mxu0 0.0
      %773 = vmatpush1.msra.mxu0 0.0
      %774 = vmatprep.subr.mxu0 0.0
      %775 = vmatpush1.msra.mxu0 0.0
      %776 = vmatprep.subr.mxu0 0.0
      %777 = vmatpush1.msra.mxu0 0.0
      %778 = vmatprep.subr.mxu0 0.0
      %779 = vmatpush1.msra.mxu0 0.0
      %780 = vmatprep.subr.mxu0 0.0
      %781 = vmatpush1.msra.mxu0 0.0
      %782 = vmatprep.subr.mxu0 0.0
      %783 = vmatpush1.msra.mxu0 0.0
      %784 = vmatprep.subr.mxu0 0.0
      %785 = vmatpush1.msra.mxu0 %v752
      %786 = vmatprep.subr.mxu0 0.0
      %787 = vmatpush1.msra.mxu0 %v751
      %788 = vmatprep.subr.mxu0 0.0
      %789 = vmatpush1.msra.mxu0 %v750
      %790 = vmatprep.subr.mxu0 0.0
      %791 = vmatpush1.msra.mxu0 %v749
      %792 = vmatprep.subr.mxu0 0.0
      %793 = vmatpush2.msra.mxu0 0.0
      %794 = vmatprep.subr.mxu0 0.0
      %795 = vmatpush2.msra.mxu0 0.0
      %796 = vmatprep.subr.mxu0 0.0
      %797 = vmatpush2.msra.mxu0 0.0
      %798 = vmatprep.subr.mxu0 0.0
      %799 = vmatpush2.msra.mxu0 0.0
      %800 = vmatprep.subr.mxu0 0.0
      %801 = vmatpush2.msra.mxu0 0.0
      %802 = vmatprep.subr.mxu0 0.0
      %803 = vmatpush2.msra.mxu0 0.0
      %804 = vmatprep.subr.mxu0 0.0
      %805 = vmatpush2.msra.mxu0 0.0
      %806 = vmatprep.subr.mxu0 0.0
      %807 = vmatpush2.msra.mxu0 0.0
      %808 = vmatprep.subr.mxu0 0.0
      %809 = vmatpush2.msra.mxu0 0.0
      %810 = vmatprep.subr.mxu0 0.0
      %811 = vmatpush2.msra.mxu0 0.0
      %812 = vmatprep.subr.mxu0 0.0
      %813 = vmatpush2.msra.mxu0 0.0
      %814 = vmatprep.subr.mxu0 0.0
      %815 = vmatpush2.msra.mxu0 0.0
      %816 = vmatprep.subr.mxu0 0.0
      %817 = vmatpush2.msra.mxu0 0.0
      %818 = vmatprep.subr.mxu0 0.0
      %819 = vmatpush2.msra.mxu0 0.0
      %820 = vmatprep.subr.mxu0 0.0
      %821 = vmatpush2.msra.mxu0 0.0
      %822 = vmatprep.subr.mxu0 0.0
      %823 = vmatpush2.msra.mxu0 0.0
      %824 = vmatprep.mubr.f32.mxu0 0.0
      %825 = vmatmul.mubr.f32.gmra.mxu0 %v384
      %v826 = vpop.f32.mrf.mxu0
      %v827 = vadd.f32 %v758, %v826
      %v828 = vpop.f32.mrf.mxu0
      %829 = vmatprep.mubr.f32.mxu0 0.0
      %830 = vmatmul.mubr.f32.gmra.mxu0 %v387
      %v831 = vpop.f32.mrf.mxu0
      %v832 = vadd.f32 %v758, %v831
      %v833 = vpop.f32.mrf.mxu0
      %834 = vmatprep.mubr.f32.mxu0 0.0
      %835 = vmatmul.mubr.f32.gmra.mxu0 %v390
      %v836 = vpop.f32.mrf.mxu0
      %v837 = vadd.f32 %v758, %v836
      %v838 = vpop.f32.mrf.mxu0
      %839 = vmatprep.mubr.f32.mxu0 0.0
      %840 = vmatmul.mubr.f32.gmra.mxu0 %v393
      %v841 = vpop.f32.mrf.mxu0
      %v842 = vadd.f32 %v758, %v841
      %v843 = vpop.f32.mrf.mxu0
      %844 = vmatprep.mubr.f32.mxu0 0.0
      %845 = vmatmul.mubr.f32.gmra.mxu0 %v396
      %v846 = vpop.f32.mrf.mxu0
      %v847 = vadd.f32 %v758, %v846
      %v848 = vpop.f32.mrf.mxu0
      %849 = vmatprep.mubr.f32.mxu0 0.0
      %850 = vmatmul.mubr.f32.gmra.mxu0 %v399
      %v851 = vpop.f32.mrf.mxu0
      %v852 = vadd.f32 %v758, %v851
      %v853 = vpop.f32.mrf.mxu0
      %854 = vmatprep.mubr.f32.mxu0 0.0
      %855 = vmatmul.mubr.f32.gmra.mxu0 %v402
      %v856 = vpop.f32.mrf.mxu0
      %v857 = vadd.f32 %v758, %v856
      %v858 = vpop.f32.mrf.mxu0
      %859 = vmatprep.mubr.f32.mxu0 0.0
      %860 = vmatmul.mubr.f32.gmra.mxu0 %v405
      %v861 = vpop.f32.mrf.mxu0
      %v862 = vadd.f32 %v758, %v861
      %v863 = vpop.f32.mrf.mxu0
      %864 = vdwg.mxu0
      %865 = vst.msk [vmem:[%s361] sm:$0xff] %vm382, %v827
      %866 = vst.msk [vmem:[%s361 + $0x8] sm:$0xff] %vm382, %v832
      %867 = vst.msk [vmem:[%s361 + $0x10] sm:$0xff] %vm382, %v837
      %868 = vst.msk [vmem:[%s361 + $0x18] sm:$0xff] %vm382, %v842
      %869 = vst.msk [vmem:[%s361 + $0x20] sm:$0xff] %vm382, %v847
      %870 = vst.msk [vmem:[%s361 + $0x28] sm:$0xff] %vm382, %v852
      %871 = vst.msk [vmem:[%s361 + $0x30] sm:$0xff] %vm382, %v857
      %872 = vst.msk [vmem:[%s361 + $0x38] sm:$0xff] %vm382, %v862
      %s873 = smul.u32 8, %s21
      %p874 = scmp.lt.s32.totalorder %s873, 31
      %s875 = scalar_select %p874, %s873, 31
      %s876 = smul.addr %s875, 8
      %s877 = scalar_lea.vmem %s7, %s876
      %s878 = smul.u32 8, %s21
      %p879 = scmp.lt.s32.totalorder %s878, 31
      %s880 = scalar_select %p879, %s878, 31
      %s881 = smul.addr %s880, 8
      %s882 = scalar_lea.vmem %s8, %s881
      %s883 = smul.u32 8, %s21
      %p884 = scmp.lt.s32.totalorder %s883, 31
      %s885 = scalar_select %p884, %s883, 31
      %s886 = smul.addr %s885, 8
      %s887 = scalar_lea.vmem %s9, %s886
      // Predicated region
      $region49: #{tpu_custom_call.1} parent=47 // pred_check
        %p888 = pneg %p191
      $region50: #{tpu_custom_call.1} parent=47 // pred_check_branch
        %890 = sbr.rel (%p888) target = $region52
      $region51: #{tpu_custom_call.1} parent=47 // pred_region
        %s891 = smul.u32 8, %s21
      $region52: #{tpu_custom_call.1} parent=47 // pred_fallthru
        _
      // Predicated region
      $region53: #{tpu_custom_call.1} parent=47 // pred_check
        %p892 = pneg %p217
      $region54: #{tpu_custom_call.1} parent=47 // pred_check_branch
        %894 = sbr.rel (%p892) target = $region56
      $region55: #{tpu_custom_call.1} parent=47 // pred_region
        %s895 = smul.u32 8, %s21
      $region56: #{tpu_custom_call.1} parent=47 // pred_fallthru
        _
      // Predicated region
      $region57: #{tpu_custom_call.1} parent=47 // pred_check
        %p896 = pneg %p243
      $region58: #{tpu_custom_call.1} parent=47 // pred_check_branch
        %898 = sbr.rel (%p896) target = $region60
      $region59: #{tpu_custom_call.1} parent=47 // pred_region
        %s899 = smul.u32 8, %s21
      $region60: #{tpu_custom_call.1} parent=47 // pred_fallthru
        _
    $region48: #{tpu_custom_call.1} parent=5 // pred_fallthru
      _
    %p900 = scmp.le.s32.totalorder 2, %s16
    // Predicated region
    $region61: #{tpu_custom_call.1} parent=5 // pred_check
      %p901 = pneg %p900
    $region62: #{tpu_custom_call.1} parent=5 // pred_check_branch
      %903 = sbr.rel (%p901) target = $region64
    $region63: #{tpu_custom_call.1} parent=5 // pred_region
      %s904 = ssub.s32 %s16, 2
      // Predicated region
      $region65: #{tpu_custom_call.1} parent=63 // pred_check
        %p905 = pneg %p197
      $region66: #{tpu_custom_call.1} parent=63 // pred_check_branch
        %907 = sbr.rel (%p905) target = $region68
      $region67: #{tpu_custom_call.1} parent=63 // pred_region
        %s908 = smul.u32 8, %s22
        %p909 = scmp.lt.s32.totalorder %s908, 31
        %s910 = scalar_select %p909, %s908, 31
        %s911 = smul.addr %s910, 8
        %s912 = scalar_lea.vmem %s7, %s911
      $region68: #{tpu_custom_call.1} parent=63 // pred_fallthru
        _
      // Predicated region
      $region69: #{tpu_custom_call.1} parent=63 // pred_check
        %p913 = pneg %p223
      $region70: #{tpu_custom_call.1} parent=63 // pred_check_branch
        %915 = sbr.rel (%p913) target = $region72
      $region71: #{tpu_custom_call.1} parent=63 // pred_region
        %s916 = smul.u32 8, %s22
        %p917 = scmp.lt.s32.totalorder %s916, 31
        %s918 = scalar_select %p917, %s916, 31
        %s919 = smul.addr %s918, 8
        %s920 = scalar_lea.vmem %s8, %s919
      $region72: #{tpu_custom_call.1} parent=63 // pred_fallthru
        _
      // Predicated region
      $region73: #{tpu_custom_call.1} parent=63 // pred_check
        %p921 = pneg %p249
      $region74: #{tpu_custom_call.1} parent=63 // pred_check_branch
        %923 = sbr.rel (%p921) target = $region76
      $region75: #{tpu_custom_call.1} parent=63 // pred_region
        %s924 = smul.u32 8, %s22
        %p925 = scmp.lt.s32.totalorder %s924, 31
        %s926 = scalar_select %p925, %s924, 31
        %s927 = smul.addr %s926, 8
        %s928 = scalar_lea.vmem %s9, %s927
      $region76: #{tpu_custom_call.1} parent=63 // pred_fallthru
        _
    $region64: #{tpu_custom_call.1} parent=5 // pred_fallthru
      _
  $region6: #{tpu_custom_call.1} parent=0 // loop_footer
    %s20 = sadd.s32 1, %s16
  $region7: #{tpu_custom_call.1} parent=0 // loop_footer_branch
    %15 = sbr.rel target = $region3
  $region8: #{tpu_custom_call.1} parent=0 // loop_exit
    _

</llo_original>
